<compile_context>
chip_gen: v7x
topology: tpu7x:2x2x1
jax: 0.10.0
libtpu: 0.0.40
codegen_flags: <defaults>
</compile_context>

<pallas_src>
import functools

import jax
import jax.numpy as jnp
from jax.experimental import pallas as pl
from jax.experimental.pallas import tpu as pltpu


def _mha_map_kernel(q_ref, k_ref, wq_ref, bq_ref, wk_ref, bk_ref, out_ref, *,
                    b_tile, num_heads, head_dim, norm, hw_valid, compute_dtype):
    # q_ref   : (BT, Q, Dq)
    # k_ref   : (BT, Dq, HW_pad)   -- NCHW with spatial flattened (no transpose)
    # wq/wk   : (hidden, Dq)    bq : (1, hidden)    bk : (hidden, 1)
    # out_ref : (BT, Q, nh*HW_pad) -- lane-dense, flatten(2) order (n, h, w)
    _, Q, _ = q_ref.shape
    HW = k_ref.shape[2]  # padded spatial extent (multiple of 128)

    # Weights loaded once per grid step (Pallas keeps the same block resident
    # across steps since the index_map is constant, so this is VMEM-only).
    wq = wq_ref[...].astype(compute_dtype)            # (hidden, Dq)
    wk = wk_ref[...].astype(compute_dtype)            # (hidden, Dq)
    bq = bq_ref[...].astype(jnp.float32)               # (1, hidden)
    bk = bk_ref[...].astype(jnp.float32)               # (hidden, 1)

    need_mask = hw_valid < HW
    if need_mask:
        # Mask padded spatial lanes to -inf so they contribute 0 to the softmax.
        col = jax.lax.broadcasted_iota(jnp.int32, (Q, HW), 1)
        lane_pad = col >= hw_valid

    # b_tile is capped small (<=4) so this static loop keeps live ranges bounded.
    for b in range(b_tile):
        # ---- query projection: (Q, Dq) @ (Dq, hidden), f32 accumulate --------
        q_b = q_ref[b].astype(compute_dtype)            # (Q, Dq)
        qp = jax.lax.dot_general(q_b, wq, (((1,), (1,)), ((), ())),
                                 preferred_element_type=jnp.float32)
        qp = (qp + bq) * norm                           # (Q, hidden), f32

        # ---- key projection (1x1 conv on NCHW == channel matmul) -------------
        # One matmul per batch element: RHS k_b pushed into the MXU once for
        # all heads.  Result stays in (hidden, HW) layout.
        k_b = k_ref[b].astype(compute_dtype)             # (Dq, HW)
        kp = jnp.dot(wk, k_b, preferred_element_type=jnp.float32) + bk  # (hidden, HW)

        # ---- per-head logits: (Q, hd) @ (hd, HW) ------------------------------
        # Sublane-aligned row slices of kp, tiny lane slices of qp; contraction
        # K = head_dim <= 128 is the right grouping on v5e/v6e/v7x alike.
        head_logits = []
        for n in range(num_heads):
            rs = n * head_dim
            kp_n = kp[rs:rs + head_dim, :].astype(compute_dtype)   # (hd, HW)
            qp_n = qp[:, rs:rs + head_dim].astype(compute_dtype)   # (Q, hd)
            s_n = jnp.dot(qp_n, kp_n, preferred_element_type=jnp.float32)  # (Q, HW)
            if need_mask:
                s_n = jnp.where(lane_pad, -jnp.inf, s_n)
            head_logits.append(s_n)

        # TODO(synk): optional `mask` argument (masked_fill with -inf before the
        # softmax) is not implemented; this kernel covers the mask=None path.

        # ---- joint softmax over all heads' spatial lanes (flatten(2)) ---------
        m = head_logits[0].max(axis=-1, keepdims=True)
        for s_n in head_logits[1:]:
            m = jnp.maximum(m, s_n.max(axis=-1, keepdims=True))
        exps = [jnp.exp(s_n - m) for s_n in head_logits]
        denom = exps[0].sum(axis=-1, keepdims=True)
        for e_n in exps[1:]:
            denom = denom + e_n.sum(axis=-1, keepdims=True)
        inv = pl.reciprocal(denom, approx=False)        # exact; matches reference

        # 128-aligned, lane-dense per-head writes into the output block.
        for n, e_n in enumerate(exps):
            out_ref[b, :, n * HW:(n + 1) * HW] = (e_n * inv).astype(out_ref.dtype)


def _choose_b_tile(B, max_tile=4):
    """Divisor of B, capped at max_tile (bounds unrolled live ranges); prefer an
    even grid length so both v7x TensorCores get equal work."""
    cands = [t for t in range(1, min(B, max_tile) + 1) if B % t == 0]
    for t in sorted(cands, reverse=True):
        if (B // t) % 2 == 0:
            return t
    return cands[-1]


def mh_attention_map(q, k, wq, bq, wk, bk, num_heads, *, b_tile=None,
                     use_bf16_matmul=False, out_dtype=jnp.float32):
    """q: (B,Q,Dq)   k: (B,Dq,H,W) NCHW   -> (B, Q, num_heads, H, W).

    use_bf16_matmul=True runs the three matmuls with bf16 operands / f32
    accumulation (recommended on v6e/v7x); note it relaxes accuracy below the
    1e-5 check used in the demo.  out_dtype=jnp.bfloat16 halves the dominant
    HBM writeback if downstream tolerates it.
    """
    B, Q, Dq = q.shape
    _, C, H, W = k.shape
    assert C == Dq
    hidden = wq.shape[0]
    assert hidden % num_heads == 0
    head_dim = hidden // num_heads
    HW = H * W
    HW_pad = ((HW + 127) // 128) * 128          # 128-aligned lane offsets per head
    norm = float(hidden / num_heads) ** (-0.5)

    if b_tile is None:
        b_tile = _choose_b_tile(B)
    assert B % b_tile == 0

    # Pure reshape of NCHW (no data movement): channels stay on the sublane
    # axis, spatial on lanes -- the layout the key projection wants.
    k_flat = k.reshape(B, Dq, HW)
    if HW_pad != HW:
        k_flat = jnp.pad(k_flat, ((0, 0), (0, 0), (0, HW_pad - HW)))
    bq2 = bq.reshape(1, hidden)
    bk2 = bk.reshape(hidden, 1)

    compute_dtype = jnp.bfloat16 if use_bf16_matmul else jnp.float32

    kernel = functools.partial(
        _mha_map_kernel, b_tile=b_tile, num_heads=num_heads,
        head_dim=head_dim, norm=norm, hw_valid=HW, compute_dtype=compute_dtype)

    out = pl.pallas_call(
        kernel,
        out_shape=jax.ShapeDtypeStruct((B, Q, num_heads * HW_pad), out_dtype),
        grid_spec=pltpu.PrefetchScalarGridSpec(
            num_scalar_prefetch=0,
            grid=(B // b_tile,),
            in_specs=[
                pl.BlockSpec((b_tile, Q, Dq), lambda b: (b, 0, 0)),          # q tile
                pl.BlockSpec((b_tile, Dq, HW_pad), lambda b: (b, 0, 0)),      # k tile
                pl.BlockSpec((hidden, Dq), lambda b: (0, 0)),                 # Wq
                pl.BlockSpec((1, hidden), lambda b: (0, 0)),                  # bq
                pl.BlockSpec((hidden, Dq), lambda b: (0, 0)),                 # Wk
                pl.BlockSpec((hidden, 1), lambda b: (0, 0)),                  # bk
            ],
            out_specs=pl.BlockSpec((b_tile, Q, num_heads * HW_pad),
                                   lambda b: (b, 0, 0)),                      # lane-dense
        ),
        compiler_params=pltpu.CompilerParams(dimension_semantics=("parallel",)),
    )(q, k_flat, wq, bq2, wk, bk2)

    out = out.reshape(B, Q, num_heads, HW_pad)
    if HW_pad != HW:
        out = out[..., :HW]
    # nn.Dropout(0.0) / eval mode is identity, so no dropout applied.
    return out.reshape(B, Q, num_heads, H, W)


def _reference(q, k, wq, bq, wk, bk, num_heads):
    """Pure-JAX reference mirroring the PyTorch forward (mask=None, dropout=0)."""
    B, Q, Dq = q.shape
    hidden = wq.shape[0]
    c = hidden // num_heads
    H, W = k.shape[2], k.shape[3]
    norm = float(hidden / num_heads) ** (-0.5)
    qp = q @ wq.T + bq                                                 # (B,Q,hidden)
    kp = jnp.einsum('bchw,oc->bohw', k, wk) + bk[None, :, None, None]  # (B,hidden,H,W)
    qh = qp.reshape(B, Q, num_heads, c)
    kh = kp.reshape(B, num_heads, c, H, W)
    weights = jnp.einsum('bqnc,bnchw->bqnhw', qh * norm, kh)
    flat = weights.reshape(B, Q, -1)
    flat = jax.nn.softmax(flat, axis=-1)
    return flat.reshape(weights.shape)


def _xavier_uniform(key, shape):
    fan_out, fan_in = shape
    a = (6.0 / (fan_in + fan_out)) ** 0.5
    return jax.random.uniform(key, shape, jnp.float32, minval=-a, maxval=a)


if __name__ == "__main__":
    # Small config consistent with the module: query_dim=hidden_dim=32, 4 heads.
    B, Q, Dq, hidden, num_heads, H, W = 2, 8, 32, 32, 4, 16, 16

    key = jax.random.PRNGKey(0)
    kq, kk, kwq, kwk = jax.random.split(key, 4)

    q = jax.random.normal(kq, (B, Q, Dq), jnp.float32)
    k = jax.random.normal(kk, (B, Dq, H, W), jnp.float32)   # NCHW, like F.conv2d input

    wq = _xavier_uniform(kwq, (hidden, Dq))
    wk = _xavier_uniform(kwk, (hidden, Dq))
    bq = jnp.zeros((hidden,), jnp.float32)                   # nn.init.zeros_
    bk = jnp.zeros((hidden,), jnp.float32)

    out = mh_attention_map(q, k, wq, bq, wk, bk, num_heads)
    out = jax.block_until_ready(out)

    ref = _reference(q, k, wq, bq, wk, bk, num_heads)
    assert out.shape == (B, Q, num_heads, H, W)
    assert jnp.allclose(out, ref, atol=1e-5, rtol=1e-5), "mismatch vs reference"

    print("KERNEL_OK")
</pallas_src>

<mosaic_0001>
module attributes {stable_mosaic.version = 11 : i64} {
  func.func @_mha_map_kernel(%arg0: i32, %arg1: memref<1x8x32xf32, #tpu.memory_space<vmem>>, %arg2: memref<1x32x256xf32, #tpu.memory_space<vmem>>, %arg3: memref<32x32xf32, #tpu.memory_space<vmem>>, %arg4: memref<1x32xf32, #tpu.memory_space<vmem>>, %arg5: memref<32x32xf32, #tpu.memory_space<vmem>>, %arg6: memref<32x1xf32, #tpu.memory_space<vmem>>, %arg7: memref<1x8x1024xf32, #tpu.memory_space<vmem>>) attributes {dimension_semantics = [#tpu.dimension_semantics<parallel>], iteration_bounds = array<i64: 2>, scalar_prefetch = 0 : i64, scratch_operands = 0 : i64, tpu.core_type = #tpu.core_type<tc>, window_params = [{transform_indices = @transform_0, window_bounds = array<i64: 1, 8, 32>}, {transform_indices = @transform_1, window_bounds = array<i64: 1, 32, 256>}, {pipeline_mode = #tpu.pipeline_mode<synchronous>, transform_indices = @transform_2, window_bounds = array<i64: 32, 32>}, {pipeline_mode = #tpu.pipeline_mode<synchronous>, transform_indices = @transform_3, window_bounds = array<i64: 1, 32>}, {pipeline_mode = #tpu.pipeline_mode<synchronous>, transform_indices = @transform_4, window_bounds = array<i64: 32, 32>}, {pipeline_mode = #tpu.pipeline_mode<synchronous>, transform_indices = @transform_5, window_bounds = array<i64: 32, 1>}, {transform_indices = @transform_6, window_bounds = array<i64: 1, 8, 1024>}]} {
    %c0 = arith.constant 0 : index
    %c0_0 = arith.constant 0 : index
    %0 = vector.load %arg3[%c0, %c0_0] : memref<32x32xf32, #tpu.memory_space<vmem>>, vector<32x32xf32>
    %c0_1 = arith.constant 0 : index
    %c0_2 = arith.constant 0 : index
    %1 = vector.load %arg5[%c0_1, %c0_2] : memref<32x32xf32, #tpu.memory_space<vmem>>, vector<32x32xf32>
    %c0_3 = arith.constant 0 : index
    %c0_4 = arith.constant 0 : index
    %2 = vector.load %arg4[%c0_3, %c0_4] : memref<1x32xf32, #tpu.memory_space<vmem>>, vector<1x32xf32>
    %c0_5 = arith.constant 0 : index
    %c0_6 = arith.constant 0 : index
    %3 = vector.load %arg6[%c0_5, %c0_6] : memref<32x1xf32, #tpu.memory_space<vmem>>, vector<32x1xf32>
    %c0_7 = arith.constant 0 : index
    %c0_8 = arith.constant 0 : index
    %c0_9 = arith.constant 0 : index
    %4 = vector.load %arg1[%c0_7, %c0_8, %c0_9] : memref<1x8x32xf32, #tpu.memory_space<vmem>>, vector<1x8x32xf32>
    %5 = vector.shape_cast %4 : vector<1x8x32xf32> to vector<8x32xf32>
    %cst = arith.constant dense<0.000000e+00> : vector<8x32xf32>
    %6 = tpu.matmul %5, %0, %cst {dimension_numbers = #tpu.dot_dimension_numbers<[1], [1], [0], [0], [0, 0, 1, 0], [], []>} : vector<8x32xf32>, vector<32x32xf32>, vector<8x32xf32> -> vector<8x32xf32>
    %7 = vector.broadcast %2 : vector<1x32xf32> to vector<8x32xf32>
    %8 = arith.addf %6, %7 : vector<8x32xf32>
    %cst_10 = arith.constant 0.353553385 : f32
    %9 = vector.broadcast %cst_10 : f32 to vector<8x32xf32>
    %10 = arith.mulf %8, %9 : vector<8x32xf32>
    %c0_11 = arith.constant 0 : index
    %c0_12 = arith.constant 0 : index
    %c0_13 = arith.constant 0 : index
    %11 = vector.load %arg2[%c0_11, %c0_12, %c0_13] : memref<1x32x256xf32, #tpu.memory_space<vmem>>, vector<1x32x256xf32>
    %12 = vector.shape_cast %11 : vector<1x32x256xf32> to vector<32x256xf32>
    %cst_14 = arith.constant dense<0.000000e+00> : vector<32x256xf32>
    %13 = tpu.matmul %1, %12, %cst_14 {dimension_numbers = #tpu.dot_dimension_numbers<[1], [0], [0], [1], [0, 0, 1, 1], [], []>} : vector<32x32xf32>, vector<32x256xf32>, vector<32x256xf32> -> vector<32x256xf32>
    %14 = vector.broadcast %3 : vector<32x1xf32> to vector<32x256xf32>
    %15 = arith.addf %13, %14 : vector<32x256xf32>
    %16 = vector.extract_strided_slice %15 {offsets = [0, 0], sizes = [8, 256], strides = [1, 1]} : vector<32x256xf32> to vector<8x256xf32>
    %17 = vector.extract_strided_slice %10 {offsets = [0, 0], sizes = [8, 8], strides = [1, 1]} : vector<8x32xf32> to vector<8x8xf32>
    %cst_15 = arith.constant dense<0.000000e+00> : vector<8x256xf32>
    %18 = tpu.matmul %17, %16, %cst_15 {dimension_numbers = #tpu.dot_dimension_numbers<[1], [0], [0], [1], [0, 0, 1, 1], [], []>} : vector<8x8xf32>, vector<8x256xf32>, vector<8x256xf32> -> vector<8x256xf32>
    %19 = vector.extract_strided_slice %15 {offsets = [8, 0], sizes = [8, 256], strides = [1, 1]} : vector<32x256xf32> to vector<8x256xf32>
    %20 = vector.extract_strided_slice %10 {offsets = [0, 8], sizes = [8, 8], strides = [1, 1]} : vector<8x32xf32> to vector<8x8xf32>
    %cst_16 = arith.constant dense<0.000000e+00> : vector<8x256xf32>
    %21 = tpu.matmul %20, %19, %cst_16 {dimension_numbers = #tpu.dot_dimension_numbers<[1], [0], [0], [1], [0, 0, 1, 1], [], []>} : vector<8x8xf32>, vector<8x256xf32>, vector<8x256xf32> -> vector<8x256xf32>
    %22 = vector.extract_strided_slice %15 {offsets = [16, 0], sizes = [8, 256], strides = [1, 1]} : vector<32x256xf32> to vector<8x256xf32>
    %23 = vector.extract_strided_slice %10 {offsets = [0, 16], sizes = [8, 8], strides = [1, 1]} : vector<8x32xf32> to vector<8x8xf32>
    %cst_17 = arith.constant dense<0.000000e+00> : vector<8x256xf32>
    %24 = tpu.matmul %23, %22, %cst_17 {dimension_numbers = #tpu.dot_dimension_numbers<[1], [0], [0], [1], [0, 0, 1, 1], [], []>} : vector<8x8xf32>, vector<8x256xf32>, vector<8x256xf32> -> vector<8x256xf32>
    %25 = vector.extract_strided_slice %15 {offsets = [24, 0], sizes = [8, 256], strides = [1, 1]} : vector<32x256xf32> to vector<8x256xf32>
    %26 = vector.extract_strided_slice %10 {offsets = [0, 24], sizes = [8, 8], strides = [1, 1]} : vector<8x32xf32> to vector<8x8xf32>
    %cst_18 = arith.constant dense<0.000000e+00> : vector<8x256xf32>
    %27 = tpu.matmul %26, %25, %cst_18 {dimension_numbers = #tpu.dot_dimension_numbers<[1], [0], [0], [1], [0, 0, 1, 1], [], []>} : vector<8x8xf32>, vector<8x256xf32>, vector<8x256xf32> -> vector<8x256xf32>
    %cst_19 = arith.constant dense<0xFF800000> : vector<8xf32>
    %28 = vector.multi_reduction <maximumf>, %18, %cst_19 [1] : vector<8x256xf32> to vector<8xf32>
    %29 = vector.shape_cast %28 : vector<8xf32> to vector<8x1xf32>
    %cst_20 = arith.constant dense<0xFF800000> : vector<8xf32>
    %30 = vector.multi_reduction <maximumf>, %21, %cst_20 [1] : vector<8x256xf32> to vector<8xf32>
    %31 = vector.shape_cast %30 : vector<8xf32> to vector<8x1xf32>
    %32 = arith.maximumf %29, %31 : vector<8x1xf32>
    %cst_21 = arith.constant dense<0xFF800000> : vector<8xf32>
    %33 = vector.multi_reduction <maximumf>, %24, %cst_21 [1] : vector<8x256xf32> to vector<8xf32>
    %34 = vector.shape_cast %33 : vector<8xf32> to vector<8x1xf32>
    %35 = arith.maximumf %32, %34 : vector<8x1xf32>
    %cst_22 = arith.constant dense<0xFF800000> : vector<8xf32>
    %36 = vector.multi_reduction <maximumf>, %27, %cst_22 [1] : vector<8x256xf32> to vector<8xf32>
    %37 = vector.shape_cast %36 : vector<8xf32> to vector<8x1xf32>
    %38 = arith.maximumf %35, %37 : vector<8x1xf32>
    %39 = vector.broadcast %38 : vector<8x1xf32> to vector<8x256xf32>
    %40 = arith.subf %18, %39 : vector<8x256xf32>
    %41 = math.exp %40 : vector<8x256xf32>
    %42 = vector.broadcast %38 : vector<8x1xf32> to vector<8x256xf32>
    %43 = arith.subf %21, %42 : vector<8x256xf32>
    %44 = math.exp %43 : vector<8x256xf32>
    %45 = vector.broadcast %38 : vector<8x1xf32> to vector<8x256xf32>
    %46 = arith.subf %24, %45 : vector<8x256xf32>
    %47 = math.exp %46 : vector<8x256xf32>
    %48 = vector.broadcast %38 : vector<8x1xf32> to vector<8x256xf32>
    %49 = arith.subf %27, %48 : vector<8x256xf32>
    %50 = math.exp %49 : vector<8x256xf32>
    %cst_23 = arith.constant dense<0.000000e+00> : vector<8xf32>
    %51 = vector.multi_reduction <add>, %41, %cst_23 [1] : vector<8x256xf32> to vector<8xf32>
    %52 = vector.shape_cast %51 : vector<8xf32> to vector<8x1xf32>
    %cst_24 = arith.constant dense<0.000000e+00> : vector<8xf32>
    %53 = vector.multi_reduction <add>, %44, %cst_24 [1] : vector<8x256xf32> to vector<8xf32>
    %54 = vector.shape_cast %53 : vector<8xf32> to vector<8x1xf32>
    %55 = arith.addf %52, %54 : vector<8x1xf32>
    %cst_25 = arith.constant dense<0.000000e+00> : vector<8xf32>
    %56 = vector.multi_reduction <add>, %47, %cst_25 [1] : vector<8x256xf32> to vector<8xf32>
    %57 = vector.shape_cast %56 : vector<8xf32> to vector<8x1xf32>
    %58 = arith.addf %55, %57 : vector<8x1xf32>
    %cst_26 = arith.constant dense<0.000000e+00> : vector<8xf32>
    %59 = vector.multi_reduction <add>, %50, %cst_26 [1] : vector<8x256xf32> to vector<8xf32>
    %60 = vector.shape_cast %59 : vector<8xf32> to vector<8x1xf32>
    %61 = arith.addf %58, %60 : vector<8x1xf32>
    %62 = tpu.reciprocal %61 : vector<8x1xf32> -> vector<8x1xf32>
    %63 = vector.broadcast %62 : vector<8x1xf32> to vector<8x256xf32>
    %64 = arith.mulf %41, %63 : vector<8x256xf32>
    %c0_27 = arith.constant 0 : index
    %c0_28 = arith.constant 0 : index
    %c0_29 = arith.constant 0 : index
    %65 = vector.load %arg7[%c0_27, %c0_28, %c0_29] : memref<1x8x1024xf32, #tpu.memory_space<vmem>>, vector<1x8x256xf32>
    %66 = vector.shape_cast %65 : vector<1x8x256xf32> to vector<8x256xf32>
    %67 = vector.shape_cast %64 : vector<8x256xf32> to vector<1x8x256xf32>
    tpu.vector_store %arg7[%c0_27, %c0_28, %c0_29], %67 {strides = array<i32>} : memref<1x8x1024xf32, #tpu.memory_space<vmem>>, vector<1x8x256xf32>,
    %68 = vector.broadcast %62 : vector<8x1xf32> to vector<8x256xf32>
    %69 = arith.mulf %44, %68 : vector<8x256xf32>
    %c0_30 = arith.constant 0 : index
    %c0_31 = arith.constant 0 : index
    %c256 = arith.constant 256 : index
    %70 = vector.load %arg7[%c0_30, %c0_31, %c256] : memref<1x8x1024xf32, #tpu.memory_space<vmem>>, vector<1x8x256xf32>
    %71 = vector.shape_cast %70 : vector<1x8x256xf32> to vector<8x256xf32>
    %72 = vector.shape_cast %69 : vector<8x256xf32> to vector<1x8x256xf32>
    tpu.vector_store %arg7[%c0_30, %c0_31, %c256], %72 {strides = array<i32>} : memref<1x8x1024xf32, #tpu.memory_space<vmem>>, vector<1x8x256xf32>,
    %73 = vector.broadcast %62 : vector<8x1xf32> to vector<8x256xf32>
    %74 = arith.mulf %47, %73 : vector<8x256xf32>
    %c0_32 = arith.constant 0 : index
    %c0_33 = arith.constant 0 : index
    %c512 = arith.constant 512 : index
    %75 = vector.load %arg7[%c0_32, %c0_33, %c512] : memref<1x8x1024xf32, #tpu.memory_space<vmem>>, vector<1x8x256xf32>
    %76 = vector.shape_cast %75 : vector<1x8x256xf32> to vector<8x256xf32>
    %77 = vector.shape_cast %74 : vector<8x256xf32> to vector<1x8x256xf32>
    tpu.vector_store %arg7[%c0_32, %c0_33, %c512], %77 {strides = array<i32>} : memref<1x8x1024xf32, #tpu.memory_space<vmem>>, vector<1x8x256xf32>,
    %78 = vector.broadcast %62 : vector<8x1xf32> to vector<8x256xf32>
    %79 = arith.mulf %50, %78 : vector<8x256xf32>
    %c0_34 = arith.constant 0 : index
    %c0_35 = arith.constant 0 : index
    %c768 = arith.constant 768 : index
    %80 = vector.load %arg7[%c0_34, %c0_35, %c768] : memref<1x8x1024xf32, #tpu.memory_space<vmem>>, vector<1x8x256xf32>
    %81 = vector.shape_cast %80 : vector<1x8x256xf32> to vector<8x256xf32>
    %82 = vector.shape_cast %79 : vector<8x256xf32> to vector<1x8x256xf32>
    tpu.vector_store %arg7[%c0_34, %c0_35, %c768], %82 {strides = array<i32>} : memref<1x8x1024xf32, #tpu.memory_space<vmem>>, vector<1x8x256xf32>,
    return
  }
  func.func @transform_0(%arg0: i32) -> (i32, i32, i32) {
    %c0_i32 = arith.constant 0 : i32
    %c0_i32_0 = arith.constant 0 : i32
    %c0_i32_1 = arith.constant 0 : i32
    return %arg0, %c0_i32, %c0_i32_0 : i32, i32, i32
  }
  func.func @transform_1(%arg0: i32) -> (i32, i32, i32) {
    %c0_i32 = arith.constant 0 : i32
    %c0_i32_0 = arith.constant 0 : i32
    %c0_i32_1 = arith.constant 0 : i32
    return %arg0, %c0_i32, %c0_i32_0 : i32, i32, i32
  }
  func.func @transform_2(%arg0: i32) -> (i32, i32) {
    %c0_i32 = arith.constant 0 : i32
    %c0_i32_0 = arith.constant 0 : i32
    %c0_i32_1 = arith.constant 0 : i32
    return %c0_i32, %c0_i32_0 : i32, i32
  }
  func.func @transform_3(%arg0: i32) -> (i32, i32) {
    %c0_i32 = arith.constant 0 : i32
    %c0_i32_0 = arith.constant 0 : i32
    %c0_i32_1 = arith.constant 0 : i32
    return %c0_i32, %c0_i32_0 : i32, i32
  }
  func.func @transform_4(%arg0: i32) -> (i32, i32) {
    %c0_i32 = arith.constant 0 : i32
    %c0_i32_0 = arith.constant 0 : i32
    %c0_i32_1 = arith.constant 0 : i32
    return %c0_i32, %c0_i32_0 : i32, i32
  }
  func.func @transform_5(%arg0: i32) -> (i32, i32) {
    %c0_i32 = arith.constant 0 : i32
    %c0_i32_0 = arith.constant 0 : i32
    %c0_i32_1 = arith.constant 0 : i32
    return %c0_i32, %c0_i32_0 : i32, i32
  }
  func.func @transform_6(%arg0: i32) -> (i32, i32, i32) {
    %c0_i32 = arith.constant 0 : i32
    %c0_i32_0 = arith.constant 0 : i32
    %c0_i32_1 = arith.constant 0 : i32
    return %arg0, %c0_i32, %c0_i32_0 : i32, i32, i32
  }
}

</mosaic_0001>

<llo_original>
// kernel: tpu_custom_call.1
$region0: #{tpu_custom_call.1}
  #allocation0 [shape = 'u32[]', space=smem, size = 0x4, offset = 0x4, fixed_abs, tag = 'smem constant byte address 0x4 - core index']
  #allocation1 [shape = 'u32[144,128]{1,0:T(1,128)}', space=vmem, size = 0x12000, scoped, tag = 'internal scratch']
  %s0 = inlined_call_operand.hbm [shape: f32[2,8,32], index: 0, kind: input, shape index: {}]
  %s1 = inlined_call_operand.hbm [shape: f32[2,32,256], index: 1, kind: input, shape index: {}]
  %s2 = inlined_call_operand.vmem [shape: f32[32,32], index: 2, kind: input, shape index: {}]
  %s3 = inlined_call_operand.vmem [shape: f32[1,32], index: 3, kind: input, shape index: {}]
  %s4 = inlined_call_operand.hbm [shape: f32[32,32], index: 4, kind: input, shape index: {}]
  %s5 = inlined_call_operand.vmem [shape: f32[32,1], index: 5, kind: input, shape index: {}]
  %s6 = inlined_call_operand.hbm [shape: f32[2,8,1024], index: 6, kind: output, shape index: {}]
  %s7 = sld [smem:[#allocation0]]
  $region69: #{tpu_custom_call.1} parent=0
    _
  %s9 = ssub.s32 1, %s7
  %s10 = scalar_select 0, %s9, %s7
  $region1: #{tpu_custom_call.1} parent=0
    #allocation2 [shape = 'u8[8192]{0}', space=vmem, size = 0x2000, scoped, tag = 'input window, operand 0']
    #allocation3 [shape = 's32[2]{0}', space=sflag, size = 0x8, scoped, tag = 'scoped memory for tpu_custom_call.1']
    #allocation4 [shape = 's32[2]{0}', space=sflag, size = 0x8, scoped, tag = 'scoped memory for tpu_custom_call.1']
    #allocation5 [shape = 'u8[65536]{0}', space=vmem, size = 0x10000, scoped, tag = 'input window, operand 1']
    #allocation6 [shape = 's32[2]{0}', space=sflag, size = 0x8, scoped, tag = 'scoped memory for tpu_custom_call.1']
    #allocation7 [shape = 'u8[16384]{0}', space=vmem, size = 0x4000, scoped, tag = 'input window, operand 4, single buffered']
    #allocation8 [shape = 'u8[65536]{0}', space=vmem, size = 0x10000, scoped, tag = 'output window, operand 0']
    %11 = vsyncpa [#allocation3], 0
    %s12 = scalar_lea.sflag [#allocation3], 1
    %13 = vsyncpa %s12, 0
    %14 = vsyncpa [#allocation6], 0
    %s15 = scalar_lea.sflag [#allocation6], 1
    %16 = vsyncpa %s15, 0
    %17 = vsyncpa [#allocation4], 0
    %s18 = scalar_lea.sflag [#allocation4], 1
    %19 = vsyncpa %s18, 0
    loop: start=0, step=1, limit=4
    $region2: #{tpu_custom_call.1} parent=1 // loop_pre_header
      _
    $region3: #{tpu_custom_call.1} parent=1 // loop_header
      %s21 = sphi 0, %s25
      %p22 = scmp.ge.s32.totalorder %s21, 4
      %s31 = sphi 0, %s33
      %s34 = sphi 0, %s31
      %s35 = sphi 0, %s34
      %s51 = sphi 0, %s35
      %s57 = sphi 0, %s59
      %s60 = sphi 0, %s57
      %s61 = sphi 0, %s60
      %s77 = sphi 0, %s61
      %s81 = sphi 0, %s81
      %s83 = sphi 0, %s81
      %s84 = sphi 0, %s83
      %s98 = sphi 0, %s84
      %s102 = sphi 0, %s102
      %s104 = sphi 0, %s102
      %s105 = sphi 0, %s104
      %s119 = sphi 0, %s105
      %s123 = sphi 0, %s123
      %s125 = sphi 0, %s123
      %s126 = sphi 0, %s125
      %s140 = sphi 0, %s126
      %s144 = sphi 0, %s144
      %s146 = sphi 0, %s144
      %s147 = sphi 0, %s146
      %s161 = sphi 0, %s147
      %s167 = sphi 0, %s169
      %s170 = sphi 0, %s167
      %s171 = sphi 0, %s170
      %s187 = sphi 0, %s171
    $region4: #{tpu_custom_call.1} parent=1 // loop_header_branch
      %24 = sbr.rel (%p22) target = $region8
    $region5: #{tpu_custom_call.1} parent=1 // loop_body
      %s26 = ssub.s32 %s21, 1
      %s27 = ssub.s32 %s21, 2
      %s28 = sadd.s32 %s21, 1
      %s29 = ssub.s32 %s21, %s28
      %p30 = scmp.eq.s32.totalorder %s29, 0
      %s32 = sadd.s32 %s31, 1
      %s33 = scalar_select %p30, %s31, %s32
      %p36 = pneg %p30
      %p37 = scmp.eq.s32.totalorder %s21, 1
      %p38 = por %p36, %p37
      %p39 = scmp.ne.s32.totalorder %s31, %s34
      %p40 = scmp.eq.s32.totalorder %s21, 0
      %p41 = por %p39, %p40
      %p42 = scmp.ne.s32.totalorder %s31, %s34
      %p43 = scmp.eq.s32.totalorder %s26, 1
      %p44 = por %p42, %p43
      %p45 = scmp.ne.s32.totalorder %s34, %s35
      %p46 = scmp.eq.s32.totalorder %s26, 0
      %p47 = por %p45, %p46
      %p48 = scmp.ne.s32.totalorder %s34, %s35
      %p49 = scmp.eq.s32.totalorder %s27, 1
      %p50 = por %p48, %p49
      %p52 = scmp.ne.s32.totalorder %s35, %s51
      %p53 = scmp.eq.s32.totalorder %s27, 0
      %p54 = por %p52, %p53
      %s55 = ssub.s32 %s21, %s28
      %p56 = scmp.eq.s32.totalorder %s55, 0
      %s58 = sadd.s32 %s57, 1
      %s59 = scalar_select %p56, %s57, %s58
      %p62 = pneg %p56
      %p63 = scmp.eq.s32.totalorder %s21, 1
      %p64 = por %p62, %p63
      %p65 = scmp.ne.s32.totalorder %s57, %s60
      %p66 = scmp.eq.s32.totalorder %s21, 0
      %p67 = por %p65, %p66
      %p68 = scmp.ne.s32.totalorder %s57, %s60
      %p69 = scmp.eq.s32.totalorder %s26, 1
      %p70 = por %p68, %p69
      %p71 = scmp.ne.s32.totalorder %s60, %s61
      %p72 = scmp.eq.s32.totalorder %s26, 0
      %p73 = por %p71, %p72
      %p74 = scmp.ne.s32.totalorder %s60, %s61
      %p75 = scmp.eq.s32.totalorder %s27, 1
      %p76 = por %p74, %p75
      %p78 = scmp.ne.s32.totalorder %s61, %s77
      %p79 = scmp.eq.s32.totalorder %s27, 0
      %p80 = por %p78, %p79
      %s82 = sadd.s32 %s81, 1
      %p85 = scmp.eq.s32.totalorder %s21, 1
      %p86 = scmp.ne.s32.totalorder %s81, %s83
      %p87 = scmp.eq.s32.totalorder %s21, 0
      %p88 = por %p86, %p87
      %p89 = scmp.ne.s32.totalorder %s81, %s83
      %p90 = scmp.eq.s32.totalorder %s26, 1
      %p91 = por %p89, %p90
      %p92 = scmp.ne.s32.totalorder %s83, %s84
      %p93 = scmp.eq.s32.totalorder %s26, 0
      %p94 = por %p92, %p93
      %p95 = scmp.ne.s32.totalorder %s83, %s84
      %p96 = scmp.eq.s32.totalorder %s27, 1
      %p97 = por %p95, %p96
      %p99 = scmp.ne.s32.totalorder %s84, %s98
      %p100 = scmp.eq.s32.totalorder %s27, 0
      %p101 = por %p99, %p100
      %s103 = sadd.s32 %s102, 1
      %p106 = scmp.eq.s32.totalorder %s21, 1
      %p107 = scmp.ne.s32.totalorder %s102, %s104
      %p108 = scmp.eq.s32.totalorder %s21, 0
      %p109 = por %p107, %p108
      %p110 = scmp.ne.s32.totalorder %s102, %s104
      %p111 = scmp.eq.s32.totalorder %s26, 1
      %p112 = por %p110, %p111
      %p113 = scmp.ne.s32.totalorder %s104, %s105
      %p114 = scmp.eq.s32.totalorder %s26, 0
      %p115 = por %p113, %p114
      %p116 = scmp.ne.s32.totalorder %s104, %s105
      %p117 = scmp.eq.s32.totalorder %s27, 1
      %p118 = por %p116, %p117
      %p120 = scmp.ne.s32.totalorder %s105, %s119
      %p121 = scmp.eq.s32.totalorder %s27, 0
      %p122 = por %p120, %p121
      %s124 = sadd.s32 %s123, 1
      %p127 = scmp.eq.s32.totalorder %s21, 1
      %p128 = scmp.ne.s32.totalorder %s123, %s125
      %p129 = scmp.eq.s32.totalorder %s21, 0
      %p130 = por %p128, %p129
      %p131 = scmp.ne.s32.totalorder %s123, %s125
      %p132 = scmp.eq.s32.totalorder %s26, 1
      %p133 = por %p131, %p132
      %p134 = scmp.ne.s32.totalorder %s125, %s126
      %p135 = scmp.eq.s32.totalorder %s26, 0
      %p136 = por %p134, %p135
      %p137 = scmp.ne.s32.totalorder %s125, %s126
      %p138 = scmp.eq.s32.totalorder %s27, 1
      %p139 = por %p137, %p138
      %p141 = scmp.ne.s32.totalorder %s126, %s140
      %p142 = scmp.eq.s32.totalorder %s27, 0
      %p143 = por %p141, %p142
      %s145 = sadd.s32 %s144, 1
      %p148 = scmp.eq.s32.totalorder %s21, 1
      %p149 = scmp.ne.s32.totalorder %s144, %s146
      %p150 = scmp.eq.s32.totalorder %s21, 0
      %p151 = por %p149, %p150
      %p152 = scmp.ne.s32.totalorder %s144, %s146
      %p153 = scmp.eq.s32.totalorder %s26, 1
      %p154 = por %p152, %p153
      %p155 = scmp.ne.s32.totalorder %s146, %s147
      %p156 = scmp.eq.s32.totalorder %s26, 0
      %p157 = por %p155, %p156
      %p158 = scmp.ne.s32.totalorder %s146, %s147
      %p159 = scmp.eq.s32.totalorder %s27, 1
      %p160 = por %p158, %p159
      %p162 = scmp.ne.s32.totalorder %s147, %s161
      %p163 = scmp.eq.s32.totalorder %s27, 0
      %p164 = por %p162, %p163
      %s165 = ssub.s32 %s21, %s28
      %p166 = scmp.eq.s32.totalorder %s165, 0
      %s168 = sadd.s32 %s167, 1
      %s169 = scalar_select %p166, %s167, %s168
      %p172 = pneg %p166
      %p173 = scmp.eq.s32.totalorder %s21, 1
      %p174 = por %p172, %p173
      %p175 = scmp.ne.s32.totalorder %s167, %s170
      %p176 = scmp.eq.s32.totalorder %s21, 0
      %p177 = por %p175, %p176
      %p178 = scmp.ne.s32.totalorder %s167, %s170
      %p179 = scmp.eq.s32.totalorder %s26, 1
      %p180 = por %p178, %p179
      %p181 = scmp.ne.s32.totalorder %s170, %s171
      %p182 = scmp.eq.s32.totalorder %s26, 0
      %p183 = por %p181, %p182
      %p184 = scmp.ne.s32.totalorder %s170, %s171
      %p185 = scmp.eq.s32.totalorder %s27, 1
      %p186 = por %p184, %p185
      %p188 = scmp.ne.s32.totalorder %s171, %s187
      %p189 = scmp.eq.s32.totalorder %s27, 0
      %p190 = por %p188, %p189
      %p191 = scmp.le.s32.totalorder 1, %s21
      %p192 = scmp.lt.s32.totalorder %s21, 3
      %p193 = pnand %p191, %p192
      %p194 = pneg %p193
      // Predicated region
      $region9: #{tpu_custom_call.1} parent=5 // pred_check
        _
      $region10: #{tpu_custom_call.1} parent=5 // pred_check_branch
        %196 = sbr.rel (%p193) target = $region12
      $region11: #{tpu_custom_call.1} parent=5 // pred_region
        %s197 = ssub.s32 %s21, 1
        // Predicated region
        $region13: #{tpu_custom_call.1} parent=11 // pred_check
          %p198 = pneg %p94
        $region14: #{tpu_custom_call.1} parent=11 // pred_check_branch
          %200 = sbr.rel (%p198) target = $region16
        $region15: #{tpu_custom_call.1} parent=11 // pred_region
          _
        $region16: #{tpu_custom_call.1} parent=11 // pred_fallthru
          _
        // Predicated region
        $region17: #{tpu_custom_call.1} parent=11 // pred_check
          %p201 = pneg %p115
        $region18: #{tpu_custom_call.1} parent=11 // pred_check_branch
          %203 = sbr.rel (%p201) target = $region20
        $region19: #{tpu_custom_call.1} parent=11 // pred_region
          _
        $region20: #{tpu_custom_call.1} parent=11 // pred_fallthru
          _
        // Predicated region
        $region21: #{tpu_custom_call.1} parent=11 // pred_check
          %p204 = pneg %p136
        $region22: #{tpu_custom_call.1} parent=11 // pred_check_branch
          %206 = sbr.rel (%p204) target = $region24
        $region23: #{tpu_custom_call.1} parent=11 // pred_region
          %s208 = ssub.s32 512, 512
          %209 = vsyncadd [#allocation6], %s208
          %s210 = sshll.u32 [#allocation7], 4
          %s211 = int_to_ptr.vmem [resolvable:$true] %s210
          %216 = dma.hbm_to_vmem [thread:$0]  %s4, 512, %s211, [#allocation6], 128, 128, 8
        $region24: #{tpu_custom_call.1} parent=11 // pred_fallthru
          _
        // Predicated region
        $region25: #{tpu_custom_call.1} parent=11 // pred_check
          %p217 = pneg %p157
        $region26: #{tpu_custom_call.1} parent=11 // pred_check_branch
          %219 = sbr.rel (%p217) target = $region28
        $region27: #{tpu_custom_call.1} parent=11 // pred_region
          _
        $region28: #{tpu_custom_call.1} parent=11 // pred_fallthru
          _
      $region12: #{tpu_custom_call.1} parent=5 // pred_fallthru
        _
      %p220 = scmp.lt.s32.totalorder %s21, 2
      // Predicated region
      $region29: #{tpu_custom_call.1} parent=5 // pred_check
        %p221 = pneg %p220
      $region30: #{tpu_custom_call.1} parent=5 // pred_check_branch
        %223 = sbr.rel (%p221) target = $region32
      $region31: #{tpu_custom_call.1} parent=5 // pred_region
        // Predicated region
        $region33: #{tpu_custom_call.1} parent=31 // pred_check
          %p224 = pneg %p41
        $region34: #{tpu_custom_call.1} parent=31 // pred_check_branch
          %226 = sbr.rel (%p224) target = $region36
        $region35: #{tpu_custom_call.1} parent=31 // pred_region
          %s227 = sand.u32 %s31, 1
          %s228 = scalar_lea.sflag [#allocation3], %s227
          %s229 = sand.u32 %s31, 1
          %s230 = smul.addr %s229, 8
          %s231 = scalar_lea.vmem [#allocation2], %s230
          %s233 = ssub.s32 128, 128
          %234 = vsyncadd %s228, %s233
          %s235 = smul.addr %s21, 128
          %s236 = scalar_lea.hbm %s0, %s235
          %s238 = sshll.u32 %s231, 4
          %s239 = int_to_ptr.vmem [resolvable:$true] %s238
          %241 = dma.hbm_to_vmem [thread:$0]  %s236, 128, %s239, %s228
        $region36: #{tpu_custom_call.1} parent=31 // pred_fallthru
          _
        // Predicated region
        $region37: #{tpu_custom_call.1} parent=31 // pred_check
          %p242 = pneg %p67
        $region38: #{tpu_custom_call.1} parent=31 // pred_check_branch
          %244 = sbr.rel (%p242) target = $region40
        $region39: #{tpu_custom_call.1} parent=31 // pred_region
          %s245 = sand.u32 %s21, 1
          %s246 = scalar_lea.sflag [#allocation6], %s245
          %s247 = sand.u32 %s57, 1
          %s248 = smul.addr %s247, 64
          %s249 = scalar_lea.vmem [#allocation5], %s248
          %s251 = ssub.s32 1024, 1024
          %252 = vsyncadd %s246, %s251
          %s253 = smul.addr %s21, 8
          %s254 = smul.addr %s253, 128
          %s255 = scalar_lea.hbm %s1, %s254
          %s256 = sshll.u32 %s249, 4
          %s257 = int_to_ptr.vmem [resolvable:$true] %s256
          %262 = dma.hbm_to_vmem [thread:$0]  %s255, 1024, %s257, %s246, 256, 256, 16
        $region40: #{tpu_custom_call.1} parent=31 // pred_fallthru
          _
      $region32: #{tpu_custom_call.1} parent=5 // pred_fallthru
        _
      %p263 = scmp.le.s32.totalorder 1, %s21
      %p264 = scmp.lt.s32.totalorder %s21, 3
      %p265 = pnand %p263, %p264
      %p266 = pneg %p265
      // Predicated region
      $region41: #{tpu_custom_call.1} parent=5 // pred_check
        _
      $region42: #{tpu_custom_call.1} parent=5 // pred_check_branch
        %268 = sbr.rel (%p265) target = $region44
      $region43: #{tpu_custom_call.1} parent=5 // pred_region
        %s269 = ssub.s32 %s21, 1
        %s270 = sand.u32 %s34, 1
        %s271 = scalar_lea.sflag [#allocation3], %s270
        %s272 = sand.u32 %s34, 1
        %s273 = smul.addr %s272, 8
        %s274 = scalar_lea.vmem [#allocation2], %s273
        // Predicated region
        $region45: #{tpu_custom_call.1} parent=43 // pred_check
          %p275 = pneg %p47
        $region46: #{tpu_custom_call.1} parent=43 // pred_check_branch
          %277 = sbr.rel (%p275) target = $region48
        $region47: #{tpu_custom_call.1} parent=43 // pred_region
          %278 = dma.done %s271, 128
        $region48: #{tpu_custom_call.1} parent=43 // pred_fallthru
          _
        %s279 = sand.u32 %s26, 1
        %s280 = scalar_lea.sflag [#allocation6], %s279
        %s281 = sand.u32 %s60, 1
        %s282 = smul.addr %s281, 64
        %s283 = scalar_lea.vmem [#allocation5], %s282
        // Predicated region
        $region49: #{tpu_custom_call.1} parent=43 // pred_check
          %p284 = pneg %p73
        $region50: #{tpu_custom_call.1} parent=43 // pred_check_branch
          %286 = sbr.rel (%p284) target = $region52
        $region51: #{tpu_custom_call.1} parent=43 // pred_region
          %287 = dma.done %s280, 1024
        $region52: #{tpu_custom_call.1} parent=43 // pred_fallthru
          _
        // Predicated region
        $region53: #{tpu_custom_call.1} parent=43 // pred_check
          %p288 = pneg %p136
        $region54: #{tpu_custom_call.1} parent=43 // pred_check_branch
          %290 = sbr.rel (%p288) target = $region56
        $region55: #{tpu_custom_call.1} parent=43 // pred_region
          %291 = dma.done [#allocation6], 512
        $region56: #{tpu_custom_call.1} parent=43 // pred_fallthru
          _
        %s292 = sand.u32 %s34, 1
        %s293 = scalar_lea.sflag [#allocation3], %s292
        %s294 = sand.u32 %s34, 1
        %s295 = smul.addr %s294, 8
        %s296 = scalar_lea.vmem [#allocation2], %s295
        %p297 = pneg %p47
        %p298 = pneg %p44
        %s299 = sand.u32 %s26, 1
        %s300 = scalar_lea.sflag [#allocation6], %s299
        %s301 = sand.u32 %s60, 1
        %s302 = smul.addr %s301, 64
        %s303 = scalar_lea.vmem [#allocation5], %s302
        %p304 = pneg %p73
        %p305 = pneg %p70
        %p306 = pneg %p94
        %p307 = pneg %p91
        %p308 = pneg %p115
        %p309 = pneg %p112
        %p310 = pneg %p136
        %p311 = pneg %p133
        %p312 = pneg %p157
        %p313 = pneg %p154
        %p314 = pneg %p183
        %p315 = pneg %p180
        %s316 = sand.u32 %s170, 1
        %s317 = scalar_lea.sflag [#allocation4], %s316
        %s318 = sand.u32 %s170, 1
        %s319 = smul.addr %s318, 64
        %s320 = scalar_lea.vmem [#allocation8], %s319
        %v321 = vld [vmem:[%s2] sm:$0xff]
        %v322 = vld [vmem:[%s2 + $0x8] sm:$0xff]
        %v323 = vld [vmem:[%s2 + $0x10] sm:$0xff]
        %v324 = vld [vmem:[%s2 + $0x18] sm:$0xff]
        %v325 = vld [vmem:[#allocation7] sm:$0xff]
        %v326 = vld [vmem:[#allocation7 + $0x8] sm:$0xff]
        %v327 = vld [vmem:[#allocation7 + $0x10] sm:$0xff]
        %v328 = vld [vmem:[#allocation7 + $0x18] sm:$0xff]
        %v329 = vld [vmem:[%s3] sm:$0x1]
        %v330 = vld [vmem:[%s5] sm:$0xff]
        %v331 = vld [vmem:[%s5 + $0x8] sm:$0xff]
        %v332 = vld [vmem:[%s5 + $0x10] sm:$0xff]
        %v333 = vld [vmem:[%s5 + $0x18] sm:$0xff]
        %v334 = vld [vmem:[%s274] sm:$0xff]
        %v336 = vlaneseq
        %v337 = vshrl.u32 %v336, 7
        %v338 = vsub.s32 0, %v337
        %v339 = vrot.slane %v329, %v338
        %vm341 = vcmask 261120
        %v343 = vsel %vm341, %v334, 0
        %v346 = vsel %vm341, %v321, 0
        %v349 = vsel %vm341, %v322, 0
        %v352 = vsel %vm341, %v323, 0
        %v355 = vsel %vm341, %v324, 0
        %357 = vmatprep.subr.mxu0 0.0
        %358 = vmatpush1.xpose.msra.mxu0 %v346
        %359 = vmatprep.subr.mxu0 0.0
        %360 = vmatpush1.xpose.msra.mxu0 %v349
        %361 = vmatprep.subr.mxu0 0.0
        %362 = vmatpush1.xpose.msra.mxu0 %v352
        %363 = vmatprep.subr.mxu0 0.0
        %364 = vmatpush1.xpose.msra.mxu0 %v355
        %365 = vmatprep.subr.mxu0 0.0
        %366 = vmatpush1.xpose.msra.mxu0 0.0
        %367 = vmatprep.subr.mxu0 0.0
        %368 = vmatpush1.xpose.msra.mxu0 0.0
        %369 = vmatprep.subr.mxu0 0.0
        %370 = vmatpush1.xpose.msra.mxu0 0.0
        %371 = vmatprep.subr.mxu0 0.0
        %372 = vmatpush1.xpose.msra.mxu0 0.0
        %373 = vmatprep.subr.mxu0 0.0
        %374 = vmatpush1.xpose.msra.mxu0 0.0
        %375 = vmatprep.subr.mxu0 0.0
        %376 = vmatpush1.xpose.msra.mxu0 0.0
        %377 = vmatprep.subr.mxu0 0.0
        %378 = vmatpush1.xpose.msra.mxu0 0.0
        %379 = vmatprep.subr.mxu0 0.0
        %380 = vmatpush1.xpose.msra.mxu0 0.0
        %381 = vmatprep.subr.mxu0 0.0
        %382 = vmatpush1.xpose.msra.mxu0 0.0
        %383 = vmatprep.subr.mxu0 0.0
        %384 = vmatpush1.xpose.msra.mxu0 0.0
        %385 = vmatprep.subr.mxu0 0.0
        %386 = vmatpush1.xpose.msra.mxu0 0.0
        %387 = vmatprep.subr.mxu0 0.0
        %388 = vmatpush1.xpose.msra.mxu0 0.0
        %389 = vmatprep.subr.mxu0 0.0
        %390 = vmatpush1.xpose.msra.mxu0 0.0
        %391 = vmatprep.subr.mxu0 0.0
        %392 = vmatpush1.xpose.msra.mxu0 0.0
        %393 = vmatprep.subr.mxu0 0.0
        %394 = vmatpush1.xpose.msra.mxu0 0.0
        %395 = vmatprep.subr.mxu0 0.0
        %396 = vmatpush1.xpose.msra.mxu0 0.0
        %397 = vmatprep.subr.mxu0 0.0
        %398 = vmatpush1.xpose.msra.mxu0 0.0
        %399 = vmatprep.subr.mxu0 0.0
        %400 = vmatpush1.xpose.msra.mxu0 0.0
        %401 = vmatprep.subr.mxu0 0.0
        %402 = vmatpush1.xpose.msra.mxu0 0.0
        %403 = vmatprep.subr.mxu0 0.0
        %404 = vmatpush1.xpose.msra.mxu0 0.0
        %405 = vmatprep.subr.mxu0 0.0
        %406 = vmatpush1.xpose.msra.mxu0 0.0
        %407 = vmatprep.subr.mxu0 0.0
        %408 = vmatpush1.xpose.msra.mxu0 0.0
        %409 = vmatprep.subr.mxu0 0.0
        %410 = vmatpush1.xpose.msra.mxu0 0.0
        %411 = vmatprep.subr.mxu0 0.0
        %412 = vmatpush1.xpose.msra.mxu0 0.0
        %413 = vmatprep.subr.mxu0 0.0
        %414 = vmatpush1.xpose.msra.mxu0 0.0
        %415 = vmatprep.subr.mxu0 0.0
        %416 = vmatpush1.xpose.msra.mxu0 0.0
        %417 = vmatprep.subr.mxu0 0.0
        %418 = vmatpush1.xpose.msra.mxu0 0.0
        %419 = vmatprep.subr.mxu0 0.0
        %420 = vmatpush1.xpose.msra.mxu0 0.0
        %421 = vmatprep.mubr.f32.mxu0 0.0
        %422 = vmatmul.mubr.f32.gmra.mrb[0].mxu0 %v343
        %v423 = vpop.f32.mrb[0].mxu0
        %v424 = vadd.f32 %v339, %v423
        %v425 = vpop.f32.mrb[0].mxu0
        %426 = vdwg.mxu0
        %v427 = vmul.f32 %v424, 0.35355338
        %v428 = vld [vmem:[%s283] sm:$0xff]
        %v429 = vld [vmem:[%s283 + $0x8] sm:$0xff]
        %v430 = vld [vmem:[%s283 + $0x10] sm:$0xff]
        %v431 = vld [vmem:[%s283 + $0x18] sm:$0xff]
        %v432 = vld [vmem:[%s283 + $0x20] sm:$0xff]
        %v433 = vld [vmem:[%s283 + $0x28] sm:$0xff]
        %v434 = vld [vmem:[%s283 + $0x30] sm:$0xff]
        %v435 = vld [vmem:[%s283 + $0x38] sm:$0xff]
        %437 = vset.pattern.permute.xlu0 0
        %438 = vperm.xlu0 %437, %v330
        %v439 = vpop.permute.xlu0 %438
        %442 = vset.pattern.permute.xlu0 0
        %443 = vperm.xlu0 %442, %v331
        %v444 = vpop.permute.xlu0 %443
        %447 = vset.pattern.permute.xlu0 0
        %448 = vperm.xlu0 %447, %v332
        %v449 = vpop.permute.xlu0 %448
        %452 = vset.pattern.permute.xlu0 0
        %453 = vperm.xlu0 %452, %v333
        %v454 = vpop.permute.xlu0 %453
        %v457 = vsel %vm341, %v325, 0
        %v460 = vsel %vm341, %v326, 0
        %v463 = vsel %vm341, %v327, 0
        %v466 = vsel %vm341, %v328, 0
        %468 = vmatprep.subr.mxu0 %v429
        %469 = vmatpush1.msra.mxu0 %v428
        %470 = vmatprep.subr.mxu0 %v431
        %471 = vmatpush1.msra.mxu0 %v430
        %472 = vmatprep.subr.mxu0 %v433
        %473 = vmatpush1.msra.mxu0 %v432
        %474 = vmatprep.subr.mxu0 %v435
        %475 = vmatpush1.msra.mxu0 %v434
        %476 = vmatprep.subr.mxu0 0.0
        %477 = vmatpush1.msra.mxu0 0.0
        %478 = vmatprep.subr.mxu0 0.0
        %479 = vmatpush1.msra.mxu0 0.0
        %480 = vmatprep.subr.mxu0 0.0
        %481 = vmatpush1.msra.mxu0 0.0
        %482 = vmatprep.subr.mxu0 0.0
        %483 = vmatpush1.msra.mxu0 0.0
        %484 = vmatprep.subr.mxu0 0.0
        %485 = vmatpush1.msra.mxu0 0.0
        %486 = vmatprep.subr.mxu0 0.0
        %487 = vmatpush1.msra.mxu0 0.0
        %488 = vmatprep.subr.mxu0 0.0
        %489 = vmatpush1.msra.mxu0 0.0
        %490 = vmatprep.subr.mxu0 0.0
        %491 = vmatpush1.msra.mxu0 0.0
        %492 = vmatprep.subr.mxu0 0.0
        %493 = vmatpush1.msra.mxu0 0.0
        %494 = vmatprep.subr.mxu0 0.0
        %495 = vmatpush1.msra.mxu0 0.0
        %496 = vmatprep.subr.mxu0 0.0
        %497 = vmatpush1.msra.mxu0 0.0
        %498 = vmatprep.subr.mxu0 0.0
        %499 = vmatpush1.msra.mxu0 0.0
        %500 = vmatprep.subr.mxu0 0.0
        %501 = vmatpush1.msra.mxu0 0.0
        %502 = vmatprep.subr.mxu0 0.0
        %503 = vmatpush1.msra.mxu0 0.0
        %504 = vmatprep.subr.mxu0 0.0
        %505 = vmatpush1.msra.mxu0 0.0
        %506 = vmatprep.subr.mxu0 0.0
        %507 = vmatpush1.msra.mxu0 0.0
        %508 = vmatprep.subr.mxu0 0.0
        %509 = vmatpush1.msra.mxu0 0.0
        %510 = vmatprep.subr.mxu0 0.0
        %511 = vmatpush1.msra.mxu0 0.0
        %512 = vmatprep.subr.mxu0 0.0
        %513 = vmatpush1.msra.mxu0 0.0
        %514 = vmatprep.subr.mxu0 0.0
        %515 = vmatpush1.msra.mxu0 0.0
        %516 = vmatprep.subr.mxu0 0.0
        %517 = vmatpush1.msra.mxu0 0.0
        %518 = vmatprep.subr.mxu0 0.0
        %519 = vmatpush1.msra.mxu0 0.0
        %520 = vmatprep.subr.mxu0 0.0
        %521 = vmatpush1.msra.mxu0 0.0
        %522 = vmatprep.subr.mxu0 0.0
        %523 = vmatpush1.msra.mxu0 0.0
        %524 = vmatprep.subr.mxu0 0.0
        %525 = vmatpush1.msra.mxu0 0.0
        %526 = vmatprep.subr.mxu0 0.0
        %527 = vmatpush1.msra.mxu0 0.0
        %528 = vmatprep.subr.mxu0 0.0
        %529 = vmatpush1.msra.mxu0 0.0
        %530 = vmatprep.subr.mxu0 0.0
        %531 = vmatpush1.msra.mxu0 0.0
        %532 = vmatprep.mubr.f32.mxu0 0.0
        %533 = vmatmul.mubr.f32.gmra.mrb[0].mxu0 %v457
        %v534 = vpop.f32.mrb[0].mxu0
        %v535 = vadd.f32 %v439, %v534
        %v536 = vpop.f32.mrb[0].mxu0
        %v537 = vadd.f32 %v439, %v536
        %538 = vmatprep.mubr.f32.mxu0 0.0
        %539 = vmatmul.mubr.f32.gmra.mrb[0].mxu0 %v460
        %v540 = vpop.f32.mrb[0].mxu0
        %v541 = vadd.f32 %v444, %v540
        %v542 = vpop.f32.mrb[0].mxu0
        %v543 = vadd.f32 %v444, %v542
        %544 = vmatprep.mubr.f32.mxu0 0.0
        %545 = vmatmul.mubr.f32.gmra.mrb[0].mxu0 %v463
        %v546 = vpop.f32.mrb[0].mxu0
        %v547 = vadd.f32 %v449, %v546
        %v548 = vpop.f32.mrb[0].mxu0
        %v549 = vadd.f32 %v449, %v548
        %550 = vmatprep.mubr.f32.mxu0 0.0
        %551 = vmatmul.mubr.f32.gmra.mrb[0].mxu0 %v466
        %v552 = vpop.f32.mrb[0].mxu0
        %v553 = vadd.f32 %v454, %v552
        %v554 = vpop.f32.mrb[0].mxu0
        %v555 = vadd.f32 %v454, %v554
        %556 = vdwg.mxu0
        %vm557 = vcmask 64512
        %v559 = vsel %vm557, %v427, 0
        %561 = vmatprep.subr.mxu0 %v537
        %562 = vmatpush1.msra.mxu0 %v535
        %563 = vmatprep.subr.mxu0 0.0
        %564 = vmatpush1.msra.mxu0 0.0
        %565 = vmatprep.subr.mxu0 0.0
        %566 = vmatpush1.msra.mxu0 0.0
        %567 = vmatprep.subr.mxu0 0.0
        %568 = vmatpush1.msra.mxu0 0.0
        %569 = vmatprep.subr.mxu0 0.0
        %570 = vmatpush1.msra.mxu0 0.0
        %571 = vmatprep.subr.mxu0 0.0
        %572 = vmatpush1.msra.mxu0 0.0
        %573 = vmatprep.subr.mxu0 0.0
        %574 = vmatpush1.msra.mxu0 0.0
        %575 = vmatprep.subr.mxu0 0.0
        %576 = vmatpush1.msra.mxu0 0.0
        %577 = vmatprep.subr.mxu0 0.0
        %578 = vmatpush1.msra.mxu0 0.0
        %579 = vmatprep.subr.mxu0 0.0
        %580 = vmatpush1.msra.mxu0 0.0
        %581 = vmatprep.subr.mxu0 0.0
        %582 = vmatpush1.msra.mxu0 0.0
        %583 = vmatprep.subr.mxu0 0.0
        %584 = vmatpush1.msra.mxu0 0.0
        %585 = vmatprep.subr.mxu0 0.0
        %586 = vmatpush1.msra.mxu0 0.0
        %587 = vmatprep.subr.mxu0 0.0
        %588 = vmatpush1.msra.mxu0 0.0
        %589 = vmatprep.subr.mxu0 0.0
        %590 = vmatpush1.msra.mxu0 0.0
        %591 = vmatprep.subr.mxu0 0.0
        %592 = vmatpush1.msra.mxu0 0.0
        %593 = vmatprep.subr.mxu0 0.0
        %594 = vmatpush1.msra.mxu0 0.0
        %595 = vmatprep.subr.mxu0 0.0
        %596 = vmatpush1.msra.mxu0 0.0
        %597 = vmatprep.subr.mxu0 0.0
        %598 = vmatpush1.msra.mxu0 0.0
        %599 = vmatprep.subr.mxu0 0.0
        %600 = vmatpush1.msra.mxu0 0.0
        %601 = vmatprep.subr.mxu0 0.0
        %602 = vmatpush1.msra.mxu0 0.0
        %603 = vmatprep.subr.mxu0 0.0
        %604 = vmatpush1.msra.mxu0 0.0
        %605 = vmatprep.subr.mxu0 0.0
        %606 = vmatpush1.msra.mxu0 0.0
        %607 = vmatprep.subr.mxu0 0.0
        %608 = vmatpush1.msra.mxu0 0.0
        %609 = vmatprep.subr.mxu0 0.0
        %610 = vmatpush1.msra.mxu0 0.0
        %611 = vmatprep.subr.mxu0 0.0
        %612 = vmatpush1.msra.mxu0 0.0
        %613 = vmatprep.subr.mxu0 0.0
        %614 = vmatpush1.msra.mxu0 0.0
        %615 = vmatprep.subr.mxu0 0.0
        %616 = vmatpush1.msra.mxu0 0.0
        %617 = vmatprep.subr.mxu0 0.0
        %618 = vmatpush1.msra.mxu0 0.0
        %619 = vmatprep.subr.mxu0 0.0
        %620 = vmatpush1.msra.mxu0 0.0
        %621 = vmatprep.subr.mxu0 0.0
        %622 = vmatpush1.msra.mxu0 0.0
        %623 = vmatprep.subr.mxu0 0.0
        %624 = vmatpush1.msra.mxu0 0.0
        %625 = vmatprep.mubr.f32.mxu0 0.0
        %626 = vmatmul.mubr.f32.gmra.mrb[0].mxu0 %v559
        %v627 = vpop.f32.mrb[0].mxu0
        %v628 = vadd.f32 0.0, %v627
        %v629 = vpop.f32.mrb[0].mxu0
        %v630 = vadd.f32 0.0, %v629
        %631 = vdwg.mxu0
        %632 = vrot.lane.b32.xlu0 %v427, 120
        %v633 = vpop.permute.xlu0 %632
        %v634 = vsel %vm557, %v633, 0
        %636 = vmatprep.subr.mxu0 %v543
        %637 = vmatpush1.msra.mxu0 %v541
        %638 = vmatprep.subr.mxu0 0.0
        %639 = vmatpush1.msra.mxu0 0.0
        %640 = vmatprep.subr.mxu0 0.0
        %641 = vmatpush1.msra.mxu0 0.0
        %642 = vmatprep.subr.mxu0 0.0
        %643 = vmatpush1.msra.mxu0 0.0
        %644 = vmatprep.subr.mxu0 0.0
        %645 = vmatpush1.msra.mxu0 0.0
        %646 = vmatprep.subr.mxu0 0.0
        %647 = vmatpush1.msra.mxu0 0.0
        %648 = vmatprep.subr.mxu0 0.0
        %649 = vmatpush1.msra.mxu0 0.0
        %650 = vmatprep.subr.mxu0 0.0
        %651 = vmatpush1.msra.mxu0 0.0
        %652 = vmatprep.subr.mxu0 0.0
        %653 = vmatpush1.msra.mxu0 0.0
        %654 = vmatprep.subr.mxu0 0.0
        %655 = vmatpush1.msra.mxu0 0.0
        %656 = vmatprep.subr.mxu0 0.0
        %657 = vmatpush1.msra.mxu0 0.0
        %658 = vmatprep.subr.mxu0 0.0
        %659 = vmatpush1.msra.mxu0 0.0
        %660 = vmatprep.subr.mxu0 0.0
        %661 = vmatpush1.msra.mxu0 0.0
        %662 = vmatprep.subr.mxu0 0.0
        %663 = vmatpush1.msra.mxu0 0.0
        %664 = vmatprep.subr.mxu0 0.0
        %665 = vmatpush1.msra.mxu0 0.0
        %666 = vmatprep.subr.mxu0 0.0
        %667 = vmatpush1.msra.mxu0 0.0
        %668 = vmatprep.subr.mxu0 0.0
        %669 = vmatpush1.msra.mxu0 0.0
        %670 = vmatprep.subr.mxu0 0.0
        %671 = vmatpush1.msra.mxu0 0.0
        %672 = vmatprep.subr.mxu0 0.0
        %673 = vmatpush1.msra.mxu0 0.0
        %674 = vmatprep.subr.mxu0 0.0
        %675 = vmatpush1.msra.mxu0 0.0
        %676 = vmatprep.subr.mxu0 0.0
        %677 = vmatpush1.msra.mxu0 0.0
        %678 = vmatprep.subr.mxu0 0.0
        %679 = vmatpush1.msra.mxu0 0.0
        %680 = vmatprep.subr.mxu0 0.0
        %681 = vmatpush1.msra.mxu0 0.0
        %682 = vmatprep.subr.mxu0 0.0
        %683 = vmatpush1.msra.mxu0 0.0
        %684 = vmatprep.subr.mxu0 0.0
        %685 = vmatpush1.msra.mxu0 0.0
        %686 = vmatprep.subr.mxu0 0.0
        %687 = vmatpush1.msra.mxu0 0.0
        %688 = vmatprep.subr.mxu0 0.0
        %689 = vmatpush1.msra.mxu0 0.0
        %690 = vmatprep.subr.mxu0 0.0
        %691 = vmatpush1.msra.mxu0 0.0
        %692 = vmatprep.subr.mxu0 0.0
        %693 = vmatpush1.msra.mxu0 0.0
        %694 = vmatprep.subr.mxu0 0.0
        %695 = vmatpush1.msra.mxu0 0.0
        %696 = vmatprep.subr.mxu0 0.0
        %697 = vmatpush1.msra.mxu0 0.0
        %698 = vmatprep.subr.mxu0 0.0
        %699 = vmatpush1.msra.mxu0 0.0
        %700 = vmatprep.mubr.f32.mxu0 0.0
        %701 = vmatmul.mubr.f32.gmra.mrb[0].mxu0 %v634
        %v702 = vpop.f32.mrb[0].mxu0
        %v703 = vadd.f32 0.0, %v702
        %v704 = vpop.f32.mrb[0].mxu0
        %v705 = vadd.f32 0.0, %v704
        %706 = vdwg.mxu0
        %707 = vrot.lane.b32.xlu0 %v427, 112
        %v708 = vpop.permute.xlu0 %707
        %v709 = vsel %vm557, %v708, 0
        %711 = vmatprep.subr.mxu0 %v549
        %712 = vmatpush1.msra.mxu0 %v547
        %713 = vmatprep.subr.mxu0 0.0
        %714 = vmatpush1.msra.mxu0 0.0
        %715 = vmatprep.subr.mxu0 0.0
        %716 = vmatpush1.msra.mxu0 0.0
        %717 = vmatprep.subr.mxu0 0.0
        %718 = vmatpush1.msra.mxu0 0.0
        %719 = vmatprep.subr.mxu0 0.0
        %720 = vmatpush1.msra.mxu0 0.0
        %721 = vmatprep.subr.mxu0 0.0
        %722 = vmatpush1.msra.mxu0 0.0
        %723 = vmatprep.subr.mxu0 0.0
        %724 = vmatpush1.msra.mxu0 0.0
        %725 = vmatprep.subr.mxu0 0.0
        %726 = vmatpush1.msra.mxu0 0.0
        %727 = vmatprep.subr.mxu0 0.0
        %728 = vmatpush1.msra.mxu0 0.0
        %729 = vmatprep.subr.mxu0 0.0
        %730 = vmatpush1.msra.mxu0 0.0
        %731 = vmatprep.subr.mxu0 0.0
        %732 = vmatpush1.msra.mxu0 0.0
        %733 = vmatprep.subr.mxu0 0.0
        %734 = vmatpush1.msra.mxu0 0.0
        %735 = vmatprep.subr.mxu0 0.0
        %736 = vmatpush1.msra.mxu0 0.0
        %737 = vmatprep.subr.mxu0 0.0
        %738 = vmatpush1.msra.mxu0 0.0
        %739 = vmatprep.subr.mxu0 0.0
        %740 = vmatpush1.msra.mxu0 0.0
        %741 = vmatprep.subr.mxu0 0.0
        %742 = vmatpush1.msra.mxu0 0.0
        %743 = vmatprep.subr.mxu0 0.0
        %744 = vmatpush1.msra.mxu0 0.0
        %745 = vmatprep.subr.mxu0 0.0
        %746 = vmatpush1.msra.mxu0 0.0
        %747 = vmatprep.subr.mxu0 0.0
        %748 = vmatpush1.msra.mxu0 0.0
        %749 = vmatprep.subr.mxu0 0.0
        %750 = vmatpush1.msra.mxu0 0.0
        %751 = vmatprep.subr.mxu0 0.0
        %752 = vmatpush1.msra.mxu0 0.0
        %753 = vmatprep.subr.mxu0 0.0
        %754 = vmatpush1.msra.mxu0 0.0
        %755 = vmatprep.subr.mxu0 0.0
        %756 = vmatpush1.msra.mxu0 0.0
        %757 = vmatprep.subr.mxu0 0.0
        %758 = vmatpush1.msra.mxu0 0.0
        %759 = vmatprep.subr.mxu0 0.0
        %760 = vmatpush1.msra.mxu0 0.0
        %761 = vmatprep.subr.mxu0 0.0
        %762 = vmatpush1.msra.mxu0 0.0
        %763 = vmatprep.subr.mxu0 0.0
        %764 = vmatpush1.msra.mxu0 0.0
        %765 = vmatprep.subr.mxu0 0.0
        %766 = vmatpush1.msra.mxu0 0.0
        %767 = vmatprep.subr.mxu0 0.0
        %768 = vmatpush1.msra.mxu0 0.0
        %769 = vmatprep.subr.mxu0 0.0
        %770 = vmatpush1.msra.mxu0 0.0
        %771 = vmatprep.subr.mxu0 0.0
        %772 = vmatpush1.msra.mxu0 0.0
        %773 = vmatprep.subr.mxu0 0.0
        %774 = vmatpush1.msra.mxu0 0.0
        %775 = vmatprep.mubr.f32.mxu0 0.0
        %776 = vmatmul.mubr.f32.gmra.mrb[0].mxu0 %v709
        %v777 = vpop.f32.mrb[0].mxu0
        %v778 = vadd.f32 0.0, %v777
        %v779 = vpop.f32.mrb[0].mxu0
        %v780 = vadd.f32 0.0, %v779
        %781 = vdwg.mxu0
        %782 = vrot.lane.b32.xlu0 %v427, 104
        %v783 = vpop.permute.xlu0 %782
        %v784 = vsel %vm557, %v783, 0
        %786 = vmatprep.subr.mxu0 %v555
        %787 = vmatpush1.msra.mxu0 %v553
        %788 = vmatprep.subr.mxu0 0.0
        %789 = vmatpush1.msra.mxu0 0.0
        %790 = vmatprep.subr.mxu0 0.0
        %791 = vmatpush1.msra.mxu0 0.0
        %792 = vmatprep.subr.mxu0 0.0
        %793 = vmatpush1.msra.mxu0 0.0
        %794 = vmatprep.subr.mxu0 0.0
        %795 = vmatpush1.msra.mxu0 0.0
        %796 = vmatprep.subr.mxu0 0.0
        %797 = vmatpush1.msra.mxu0 0.0
        %798 = vmatprep.subr.mxu0 0.0
        %799 = vmatpush1.msra.mxu0 0.0
        %800 = vmatprep.subr.mxu0 0.0
        %801 = vmatpush1.msra.mxu0 0.0
        %802 = vmatprep.subr.mxu0 0.0
        %803 = vmatpush1.msra.mxu0 0.0
        %804 = vmatprep.subr.mxu0 0.0
        %805 = vmatpush1.msra.mxu0 0.0
        %806 = vmatprep.subr.mxu0 0.0
        %807 = vmatpush1.msra.mxu0 0.0
        %808 = vmatprep.subr.mxu0 0.0
        %809 = vmatpush1.msra.mxu0 0.0
        %810 = vmatprep.subr.mxu0 0.0
        %811 = vmatpush1.msra.mxu0 0.0
        %812 = vmatprep.subr.mxu0 0.0
        %813 = vmatpush1.msra.mxu0 0.0
        %814 = vmatprep.subr.mxu0 0.0
        %815 = vmatpush1.msra.mxu0 0.0
        %816 = vmatprep.subr.mxu0 0.0
        %817 = vmatpush1.msra.mxu0 0.0
        %818 = vmatprep.subr.mxu0 0.0
        %819 = vmatpush1.msra.mxu0 0.0
        %820 = vmatprep.subr.mxu0 0.0
        %821 = vmatpush1.msra.mxu0 0.0
        %822 = vmatprep.subr.mxu0 0.0
        %823 = vmatpush1.msra.mxu0 0.0
        %824 = vmatprep.subr.mxu0 0.0
        %825 = vmatpush1.msra.mxu0 0.0
        %826 = vmatprep.subr.mxu0 0.0
        %827 = vmatpush1.msra.mxu0 0.0
        %828 = vmatprep.subr.mxu0 0.0
        %829 = vmatpush1.msra.mxu0 0.0
        %830 = vmatprep.subr.mxu0 0.0
        %831 = vmatpush1.msra.mxu0 0.0
        %832 = vmatprep.subr.mxu0 0.0
        %833 = vmatpush1.msra.mxu0 0.0
        %834 = vmatprep.subr.mxu0 0.0
        %835 = vmatpush1.msra.mxu0 0.0
        %836 = vmatprep.subr.mxu0 0.0
        %837 = vmatpush1.msra.mxu0 0.0
        %838 = vmatprep.subr.mxu0 0.0
        %839 = vmatpush1.msra.mxu0 0.0
        %840 = vmatprep.subr.mxu0 0.0
        %841 = vmatpush1.msra.mxu0 0.0
        %842 = vmatprep.subr.mxu0 0.0
        %843 = vmatpush1.msra.mxu0 0.0
        %844 = vmatprep.subr.mxu0 0.0
        %845 = vmatpush1.msra.mxu0 0.0
        %846 = vmatprep.subr.mxu0 0.0
        %847 = vmatpush1.msra.mxu0 0.0
        %848 = vmatprep.subr.mxu0 0.0
        %849 = vmatpush1.msra.mxu0 0.0
        %850 = vmatprep.mubr.f32.mxu0 0.0
        %851 = vmatmul.mubr.f32.gmra.mrb[0].mxu0 %v784
        %v852 = vpop.f32.mrb[0].mxu0
        %v853 = vadd.f32 0.0, %v852
        %v854 = vpop.f32.mrb[0].mxu0
        %v855 = vadd.f32 0.0, %v854
        %856 = vdwg.mxu0
        %v857 = vmax.f32 %v628, %v630
        %858 = vmax.xlane.f32.xlu0 %v857
        %v859 = vpop.xlane.xlu0 %858
        %v860 = vmax.f32 %v703, %v705
        %861 = vmax.xlane.f32.xlu0 %v860
        %v862 = vpop.xlane.xlu0 %861
        %v863 = vmax.f32 %v859, %v862
        %v864 = vmax.f32 %v778, %v780
        %865 = vmax.xlane.f32.xlu0 %v864
        %v866 = vpop.xlane.xlu0 %865
        %v867 = vmax.f32 %v863, %v866
        %v868 = vmax.f32 %v853, %v855
        %869 = vmax.xlane.f32.xlu0 %v868
        %v870 = vpop.xlane.xlu0 %869
        %v871 = vmax.f32 %v867, %v870
        %v872 = vsub.f32 %v628, %v871
        %v873 = vsub.f32 %v630, %v871
        %v874 = vmul.f32 %v872, 1.442695
        %v875 = vpow.pop %v874
        %v876 = vmul.f32 %v873, 1.442695
        %v877 = vpow.pop %v876
        %v878 = vsub.f32 %v703, %v871
        %v879 = vsub.f32 %v705, %v871
        %v880 = vmul.f32 %v878, 1.442695
        %v881 = vpow.pop %v880
        %v882 = vmul.f32 %v879, 1.442695
        %v883 = vpow.pop %v882
        %v884 = vsub.f32 %v778, %v871
        %v885 = vsub.f32 %v780, %v871
        %v886 = vmul.f32 %v884, 1.442695
        %v887 = vpow.pop %v886
        %v888 = vmul.f32 %v885, 1.442695
        %v889 = vpow.pop %v888
        %v890 = vsub.f32 %v853, %v871
        %v891 = vsub.f32 %v855, %v871
        %v892 = vmul.f32 %v890, 1.442695
        %v893 = vpow.pop %v892
        %v894 = vmul.f32 %v891, 1.442695
        %v895 = vpow.pop %v894
        %v896 = vadd.f32 %v875, %v877
        %897 = vadd.xlane.f32.xlu0 %v896
        %v898 = vpop.xlane.xlu0 %897
        %v899 = vadd.f32 %v881, %v883
        %900 = vadd.xlane.f32.xlu0 %v899
        %v901 = vpop.xlane.xlu0 %900
        %v902 = vadd.f32 %v898, %v901
        %v903 = vadd.f32 %v887, %v889
        %904 = vadd.xlane.f32.xlu0 %v903
        %v905 = vpop.xlane.xlu0 %904
        %v906 = vadd.f32 %v902, %v905
        %v907 = vadd.f32 %v893, %v895
        %908 = vadd.xlane.f32.xlu0 %v907
        %v909 = vpop.xlane.xlu0 %908
        %v910 = vadd.f32 %v906, %v909
        %v911 = vrcp.pop %v910
        %v912 = vmul.f32 %v875, %v911
        %v913 = vmul.f32 %v877, %v911
        %914 = vst [vmem:[%s320] sm:$0xff] %v912
        %915 = vst [vmem:[%s320 + $0x8] sm:$0xff] %v913
        %v916 = vmul.f32 %v881, %v911
        %v917 = vmul.f32 %v883, %v911
        %918 = vst [vmem:[%s320 + $0x10] sm:$0xff] %v916
        %919 = vst [vmem:[%s320 + $0x18] sm:$0xff] %v917
        %v920 = vmul.f32 %v887, %v911
        %v921 = vmul.f32 %v889, %v911
        %922 = vst [vmem:[%s320 + $0x20] sm:$0xff] %v920
        %923 = vst [vmem:[%s320 + $0x28] sm:$0xff] %v921
        %v924 = vmul.f32 %v893, %v911
        %v925 = vmul.f32 %v895, %v911
        %926 = vst [vmem:[%s320 + $0x30] sm:$0xff] %v924
        %927 = vst [vmem:[%s320 + $0x38] sm:$0xff] %v925
        %s928 = sand.u32 %s170, 1
        %s929 = scalar_lea.sflag [#allocation4], %s928
        %s930 = sand.u32 %s170, 1
        %s931 = smul.addr %s930, 64
        %s932 = scalar_lea.vmem [#allocation8], %s931
        // Predicated region
        $region57: #{tpu_custom_call.1} parent=43 // pred_check
          %p933 = pneg %p180
        $region58: #{tpu_custom_call.1} parent=43 // pred_check_branch
          %935 = sbr.rel (%p933) target = $region60
        $region59: #{tpu_custom_call.1} parent=43 // pred_region
          %s937 = ssub.s32 1024, 1024
          %938 = vsyncadd %s929, %s937
          %s939 = smul.addr %s26, 8
          %s940 = smul.addr %s939, 128
          %s941 = scalar_lea.hbm %s6, %s940
          %s943 = sshll.u32 %s932, 4
          %s944 = int_to_ptr.vmem [resolvable:$true] %s943
          %946 = dma.vmem_to_hbm [thread:$0]  %s944, 1024, %s941, %s929
        $region60: #{tpu_custom_call.1} parent=43 // pred_fallthru
          _
      $region44: #{tpu_custom_call.1} parent=5 // pred_fallthru
        _
      %p947 = scmp.le.s32.totalorder 2, %s21
      // Predicated region
      $region61: #{tpu_custom_call.1} parent=5 // pred_check
        %p948 = pneg %p947
      $region62: #{tpu_custom_call.1} parent=5 // pred_check_branch
        %950 = sbr.rel (%p948) target = $region64
      $region63: #{tpu_custom_call.1} parent=5 // pred_region
        %s951 = ssub.s32 %s21, 2
        // Predicated region
        $region65: #{tpu_custom_call.1} parent=63 // pred_check
          %p952 = pneg %p186
        $region66: #{tpu_custom_call.1} parent=63 // pred_check_branch
          %954 = sbr.rel (%p952) target = $region68
        $region67: #{tpu_custom_call.1} parent=63 // pred_region
          %s955 = sand.u32 %s171, 1
          %s956 = scalar_lea.sflag [#allocation4], %s955
          %s957 = sand.u32 %s171, 1
          %s958 = smul.addr %s957, 64
          %s959 = scalar_lea.vmem [#allocation8], %s958
          %960 = dma.done %s956, 1024
        $region68: #{tpu_custom_call.1} parent=63 // pred_fallthru
          _
      $region64: #{tpu_custom_call.1} parent=5 // pred_fallthru
        _
    $region6: #{tpu_custom_call.1} parent=1 // loop_footer
      %s25 = sadd.s32 1, %s21
    $region7: #{tpu_custom_call.1} parent=1 // loop_footer_branch
      %20 = sbr.rel target = $region3
    $region8: #{tpu_custom_call.1} parent=1 // loop_exit
      _
    %961 = vsyncpa [#allocation3], 1
    %s962 = scalar_lea.sflag [#allocation3], 1
    %963 = vsyncpa %s962, 1
    %964 = vsyncpa [#allocation6], 1
    %s965 = scalar_lea.sflag [#allocation6], 1
    %966 = vsyncpa %s965, 1
    %967 = vsyncpa [#allocation4], 1
    %s968 = scalar_lea.sflag [#allocation4], 1
    %969 = vsyncpa %s968, 1

</llo_original>
